<compile_context>
chip_gen: v6e
topology: v6e:2x2x1
jax: 0.10.0
libtpu: 0.0.40
codegen_flags: <defaults>
</compile_context>

<pallas_src>
import jax
import jax.numpy as jnp
from jax.experimental import pallas as pl
from jax.experimental.pallas import tpu as pltpu


def gru_cell_kernel(x_ref, h_ref, adjt_ref, w_ref, b_ref, o_ref):
    # x_ref:    (Bblk, N, C)   inputs, node-major / channel-on-lanes
    # h_ref:    (Bblk, N, U)   previous hidden state (lane-dense)
    # adjt_ref: (N, N)         transposed adjacency: adjt[n, m] = adj[m, n]
    # w_ref:    (C, N, 2U)     stacked [update; candidate] weights, lane-dense
    # b_ref:    (1, 2U)        stacked biases, lane-dense
    # o_ref:    (Bblk, N, U)   new hidden state (lane-dense)
    bblk, n_nodes, C = x_ref.shape
    U = h_ref.shape[2]

    xv = x_ref[...].astype(jnp.float32)      # (Bblk, N, C)  tiny, load once
    wv = w_ref[...].astype(jnp.float32)      # (C, N, 2U)
    adjt = adjt_ref[...].astype(jnp.float32)  # (N, N)
    bias = b_ref[...].astype(jnp.float32)    # (1, 2U)

    # Short unrolled loop over the batch block keeps the working set per
    # iteration to a single (N, 2U) slab (bounded live ranges).
    for b in range(bblk):
        xb = xv[b]                                        # (N, C)
        # Channel contraction shared by both stacked gates (unrolled, C small):
        #   a[m, o] = sum_c x[b, c, m] * w_stacked[o, c, m]
        a_b = xb[:, 0:1] * wv[0]                          # (N, 1)*(N, 2U) -> (N, 2U)
        for c in range(1, C):
            a_b = a_b + xb[:, c:c + 1] * wv[c]

        # One MXU matmul per batch element over the node (message) dimension,
        # with the stacked-gate axis lane-dense in the result:
        #   pre[n, o] = sum_m adj[m, n] * a[m, o]
        pre = jnp.dot(adjt, a_b,
                      preferred_element_type=jnp.float32,
                      precision=jax.lax.Precision.HIGHEST) + bias   # (N, 2U)

        u = jax.nn.sigmoid(pre[:, :U])        # update gate        (N, U)
        cand = jnp.tanh(pre[:, U:])           # candidate (tanh)   (N, U)
        hb = h_ref[b].astype(jnp.float32)     # (N, U)
        o_ref[b] = (u * hb + (1.0 - u) * cand).astype(o_ref.dtype)


def _pick_batch_block(batch, n_nodes, c_in, num_units, itemsize=4):
    """Pick a divisor of `batch` for the batch block.

    Budgeted against VMEM (counting lane padding to 128 and double-buffered
    pipelined blocks), capped to keep the in-kernel unroll small, and capped at
    batch//2 so the "parallel" grid axis has >= 2 steps (both v7x TensorCores
    get work).  Small enough to be safe on v7x's 64 MiB VMEM.
    """
    def padded_bytes(sub, lane):
        return (-(-sub // 8) * 8) * (-(-lane // 128) * 128) * itemsize

    # Per batch element: double-buffered x'(N,C), h'(N,U) and out'(N,U) blocks.
    per_b = 2 * (padded_bytes(n_nodes, c_in) + 2 * padded_bytes(n_nodes, num_units))
    budget = 4 << 20                       # ~4 MiB for the batch-blocked operands
    cap = max(1, min(budget // per_b, 8, batch))
    if batch >= 2:
        cap = min(cap, max(1, batch // 2))  # keep >= 2 grid steps for megacore
    bblk = 1
    for d in range(1, int(cap) + 1):
        if batch % d == 0:
            bblk = d
    return bblk


def gru_cell(x, h, adj, wr, wu, wc, br, bu, bc):
    """CUTS_Plus GRUCell forward (concat_h=False, tanh activation).

    wr / br (reset gate) are accepted for signature parity with the PyTorch
    module but are mathematically dead when concat_h=False, so they are never
    passed to (or DMA'd by) the kernel.
    """
    del wr, br
    B, C, N = x.shape
    U = h.shape[1]
    out_dtype = jnp.result_type(x.dtype, h.dtype)

    # Wrapper-side layout plumbing (outside the kernel): make the trailing
    # (lane) dimension the wide one everywhere.
    x_t = x.transpose(0, 2, 1)                                     # (B, N, C)
    h_t = h.transpose(0, 2, 1)                                     # (B, N, U)
    adj_t = adj.T                                                  # (N, N): adj_t[n, m] = adj[m, n]
    w_uc = jnp.concatenate([wu, wc], axis=0).transpose(1, 2, 0)    # (C, N, 2U)
    b_uc = jnp.concatenate([bu, bc], axis=0).reshape(1, 2 * U)     # (1, 2U)

    bblk = _pick_batch_block(B, N, C, U, jnp.dtype(out_dtype).itemsize)
    grid = (B // bblk,)

    out_t = pl.pallas_call(
        gru_cell_kernel,
        out_shape=jax.ShapeDtypeStruct((B, N, U), out_dtype),
        grid=grid,
        in_specs=[
            pl.BlockSpec((bblk, N, C), lambda i: (i, 0, 0)),       # x'   (batch-blocked)
            pl.BlockSpec((bblk, N, U), lambda i: (i, 0, 0)),       # h'   (batch-blocked)
            pl.BlockSpec((N, N), lambda i: (0, 0)),                # adj^T (grid-invariant)
            pl.BlockSpec((C, N, 2 * U), lambda i: (0, 0, 0)),      # stacked W[u;c]
            pl.BlockSpec((1, 2 * U), lambda i: (0, 0)),            # stacked bias
        ],
        out_specs=pl.BlockSpec((bblk, N, U), lambda i: (i, 0, 0)),
        compiler_params=pltpu.CompilerParams(
            dimension_semantics=("parallel",)),                    # megacore over batch blocks
    )(x_t, h_t, adj_t, w_uc, b_uc)

    return out_t.transpose(0, 2, 1)                                # (B, U, N)


def gru_cell_reference(x, h, adj, wr, wu, wc, br, bu, bc):
    """Pure-JAX reference following the PyTorch code path literally."""
    B, C, N = x.shape

    def mpnn(w3, b):
        w2 = w3.reshape(w3.shape[0], C * N)                        # Conv1d weight (U, C*N)
        xm = x[:, :, :, None] * adj[None, None, :, :]              # (B, C, M, N)
        xm = xm.reshape(B, C * N, N)                               # 'b c m n -> b (c m) n'
        return jnp.einsum('oi,bin->bon', w2, xm,
                          precision=jax.lax.Precision.HIGHEST) + b[None, :, :]

    r = jax.nn.sigmoid(mpnn(wr, br))
    u = jax.nn.sigmoid(mpnn(wu, bu))
    _ = r * h                                                      # ignored when concat_h=False
    c = jnp.tanh(mpnn(wc, bc))
    return u * h + (1.0 - u) * c


if __name__ == "__main__":
    B, d_in, n_nodes, num_units = 2, 4, 16, 32
    C, N, U = d_in, n_nodes, num_units

    key = jax.random.PRNGKey(0)
    ks = jax.random.split(key, 10)
    x = jax.random.normal(ks[0], (B, C, N), jnp.float32)
    h = jax.random.normal(ks[1], (B, U, N), jnp.float32)
    adj = jax.random.uniform(ks[2], (N, N), jnp.float32)

    # Deterministic Conv1d-style init: U(-1/sqrt(fan_in), 1/sqrt(fan_in)), fan_in = C*N.
    bound = float(1.0 / (C * N) ** 0.5)
    wr = jax.random.uniform(ks[3], (U, C, N), jnp.float32, -bound, bound)
    wu = jax.random.uniform(ks[4], (U, C, N), jnp.float32, -bound, bound)
    wc = jax.random.uniform(ks[5], (U, C, N), jnp.float32, -bound, bound)
    br = jax.random.uniform(ks[6], (U, 1), jnp.float32, -bound, bound)
    bu = jax.random.uniform(ks[7], (U, 1), jnp.float32, -bound, bound)
    bc = jax.random.uniform(ks[8], (U, 1), jnp.float32, -bound, bound)

    out = gru_cell(x, h, adj, wr, wu, wc, br, bu, bc)
    out = jax.block_until_ready(out)

    ref = gru_cell_reference(x, h, adj, wr, wu, wc, br, bu, bc)
    assert out.shape == (B, U, N)
    assert jnp.allclose(out, ref, atol=1e-4, rtol=1e-4), "mismatch vs reference"
    print("KERNEL_OK")
</pallas_src>

<mosaic_0001>
module attributes {stable_mosaic.version = 11 : i64} {
  func.func @gru_cell_kernel(%arg0: i32, %arg1: memref<1x16x4xf32, #tpu.memory_space<vmem>>, %arg2: memref<1x16x32xf32, #tpu.memory_space<vmem>>, %arg3: memref<16x16xf32, #tpu.memory_space<vmem>>, %arg4: memref<4x16x64xf32, #tpu.memory_space<vmem>>, %arg5: memref<1x64xf32, #tpu.memory_space<vmem>>, %arg6: memref<1x16x32xf32, #tpu.memory_space<vmem>>) attributes {dimension_semantics = [#tpu.dimension_semantics<parallel>], iteration_bounds = array<i64: 2>, scalar_prefetch = 0 : i64, scratch_operands = 0 : i64, tpu.core_type = #tpu.core_type<tc>, window_params = [{transform_indices = @transform_0, window_bounds = array<i64: 1, 16, 4>}, {transform_indices = @transform_1, window_bounds = array<i64: 1, 16, 32>}, {pipeline_mode = #tpu.pipeline_mode<synchronous>, transform_indices = @transform_2, window_bounds = array<i64: 16, 16>}, {pipeline_mode = #tpu.pipeline_mode<synchronous>, transform_indices = @transform_3, window_bounds = array<i64: 4, 16, 64>}, {pipeline_mode = #tpu.pipeline_mode<synchronous>, transform_indices = @transform_4, window_bounds = array<i64: 1, 64>}, {transform_indices = @transform_5, window_bounds = array<i64: 1, 16, 32>}]} {
    %c0 = arith.constant 0 : index
    %c0_0 = arith.constant 0 : index
    %c0_1 = arith.constant 0 : index
    %0 = vector.load %arg1[%c0, %c0_0, %c0_1] : memref<1x16x4xf32, #tpu.memory_space<vmem>>, vector<1x16x4xf32>
    %c0_2 = arith.constant 0 : index
    %c0_3 = arith.constant 0 : index
    %c0_4 = arith.constant 0 : index
    %1 = vector.load %arg4[%c0_2, %c0_3, %c0_4] : memref<4x16x64xf32, #tpu.memory_space<vmem>>, vector<4x16x64xf32>
    %c0_5 = arith.constant 0 : index
    %c0_6 = arith.constant 0 : index
    %2 = vector.load %arg3[%c0_5, %c0_6] : memref<16x16xf32, #tpu.memory_space<vmem>>, vector<16x16xf32>
    %c0_7 = arith.constant 0 : index
    %c0_8 = arith.constant 0 : index
    %3 = vector.load %arg5[%c0_7, %c0_8] : memref<1x64xf32, #tpu.memory_space<vmem>>, vector<1x64xf32>
    %4 = vector.shape_cast %0 : vector<1x16x4xf32> to vector<16x4xf32>
    %5 = vector.extract_strided_slice %4 {offsets = [0, 0], sizes = [16, 1], strides = [1, 1]} : vector<16x4xf32> to vector<16x1xf32>
    %6 = vector.extract_strided_slice %1 {offsets = [0, 0, 0], sizes = [1, 16, 64], strides = [1, 1, 1]} : vector<4x16x64xf32> to vector<1x16x64xf32>
    %7 = vector.shape_cast %6 : vector<1x16x64xf32> to vector<16x64xf32>
    %8 = vector.broadcast %5 : vector<16x1xf32> to vector<16x64xf32>
    %9 = arith.mulf %8, %7 : vector<16x64xf32>
    %10 = vector.extract_strided_slice %4 {offsets = [0, 1], sizes = [16, 1], strides = [1, 1]} : vector<16x4xf32> to vector<16x1xf32>
    %11 = vector.extract_strided_slice %1 {offsets = [1, 0, 0], sizes = [1, 16, 64], strides = [1, 1, 1]} : vector<4x16x64xf32> to vector<1x16x64xf32>
    %12 = vector.shape_cast %11 : vector<1x16x64xf32> to vector<16x64xf32>
    %13 = vector.broadcast %10 : vector<16x1xf32> to vector<16x64xf32>
    %14 = arith.mulf %13, %12 : vector<16x64xf32>
    %15 = arith.addf %9, %14 : vector<16x64xf32>
    %16 = vector.extract_strided_slice %4 {offsets = [0, 2], sizes = [16, 1], strides = [1, 1]} : vector<16x4xf32> to vector<16x1xf32>
    %17 = vector.extract_strided_slice %1 {offsets = [2, 0, 0], sizes = [1, 16, 64], strides = [1, 1, 1]} : vector<4x16x64xf32> to vector<1x16x64xf32>
    %18 = vector.shape_cast %17 : vector<1x16x64xf32> to vector<16x64xf32>
    %19 = vector.broadcast %16 : vector<16x1xf32> to vector<16x64xf32>
    %20 = arith.mulf %19, %18 : vector<16x64xf32>
    %21 = arith.addf %15, %20 : vector<16x64xf32>
    %22 = vector.extract_strided_slice %4 {offsets = [0, 3], sizes = [16, 1], strides = [1, 1]} : vector<16x4xf32> to vector<16x1xf32>
    %23 = vector.extract_strided_slice %1 {offsets = [3, 0, 0], sizes = [1, 16, 64], strides = [1, 1, 1]} : vector<4x16x64xf32> to vector<1x16x64xf32>
    %24 = vector.shape_cast %23 : vector<1x16x64xf32> to vector<16x64xf32>
    %25 = vector.broadcast %22 : vector<16x1xf32> to vector<16x64xf32>
    %26 = arith.mulf %25, %24 : vector<16x64xf32>
    %27 = arith.addf %21, %26 : vector<16x64xf32>
    %cst = arith.constant dense<0.000000e+00> : vector<16x64xf32>
    %28 = tpu.matmul %2, %27, %cst {dimension_numbers = #tpu.dot_dimension_numbers<[1], [0], [0], [1], [0, 0, 1, 1], [], []>, precision = #tpu.contract_precision<fp32>} : vector<16x16xf32>, vector<16x64xf32>, vector<16x64xf32> -> vector<16x64xf32>
    %29 = vector.broadcast %3 : vector<1x64xf32> to vector<16x64xf32>
    %30 = arith.addf %28, %29 : vector<16x64xf32>
    %31 = vector.extract_strided_slice %30 {offsets = [0, 0], sizes = [16, 32], strides = [1, 1]} : vector<16x64xf32> to vector<16x32xf32>
    %32 = arith.negf %31 : vector<16x32xf32>
    %33 = math.exp %32 : vector<16x32xf32>
    %cst_9 = arith.constant 1.000000e+00 : f32
    %34 = vector.broadcast %cst_9 : f32 to vector<16x32xf32>
    %35 = arith.addf %34, %33 : vector<16x32xf32>
    %36 = arith.divf %34, %35 : vector<16x32xf32>
    %37 = vector.extract_strided_slice %30 {offsets = [0, 32], sizes = [16, 32], strides = [1, 1]} : vector<16x64xf32> to vector<16x32xf32>
    %38 = math.tanh %37 : vector<16x32xf32>
    %c0_10 = arith.constant 0 : index
    %c0_11 = arith.constant 0 : index
    %c0_12 = arith.constant 0 : index
    %39 = vector.load %arg2[%c0_10, %c0_11, %c0_12] : memref<1x16x32xf32, #tpu.memory_space<vmem>>, vector<1x16x32xf32>
    %40 = vector.shape_cast %39 : vector<1x16x32xf32> to vector<16x32xf32>
    %41 = arith.mulf %36, %40 : vector<16x32xf32>
    %cst_13 = arith.constant 1.000000e+00 : f32
    %42 = vector.broadcast %cst_13 : f32 to vector<16x32xf32>
    %43 = arith.subf %42, %36 : vector<16x32xf32>
    %44 = arith.mulf %43, %38 : vector<16x32xf32>
    %45 = arith.addf %41, %44 : vector<16x32xf32>
    %c0_14 = arith.constant 0 : index
    %c0_15 = arith.constant 0 : index
    %c0_16 = arith.constant 0 : index
    %46 = vector.load %arg6[%c0_14, %c0_15, %c0_16] : memref<1x16x32xf32, #tpu.memory_space<vmem>>, vector<1x16x32xf32>
    %47 = vector.shape_cast %46 : vector<1x16x32xf32> to vector<16x32xf32>
    %48 = vector.shape_cast %45 : vector<16x32xf32> to vector<1x16x32xf32>
    tpu.vector_store %arg6[%c0_14, %c0_15, %c0_16], %48 {strides = array<i32>} : memref<1x16x32xf32, #tpu.memory_space<vmem>>, vector<1x16x32xf32>,
    return
  }
  func.func @transform_0(%arg0: i32) -> (i32, i32, i32) {
    %c0_i32 = arith.constant 0 : i32
    %c0_i32_0 = arith.constant 0 : i32
    %c0_i32_1 = arith.constant 0 : i32
    return %arg0, %c0_i32, %c0_i32_0 : i32, i32, i32
  }
  func.func @transform_1(%arg0: i32) -> (i32, i32, i32) {
    %c0_i32 = arith.constant 0 : i32
    %c0_i32_0 = arith.constant 0 : i32
    %c0_i32_1 = arith.constant 0 : i32
    return %arg0, %c0_i32, %c0_i32_0 : i32, i32, i32
  }
  func.func @transform_2(%arg0: i32) -> (i32, i32) {
    %c0_i32 = arith.constant 0 : i32
    %c0_i32_0 = arith.constant 0 : i32
    %c0_i32_1 = arith.constant 0 : i32
    return %c0_i32, %c0_i32_0 : i32, i32
  }
  func.func @transform_3(%arg0: i32) -> (i32, i32, i32) {
    %c0_i32 = arith.constant 0 : i32
    %c0_i32_0 = arith.constant 0 : i32
    %c0_i32_1 = arith.constant 0 : i32
    %c0_i32_2 = arith.constant 0 : i32
    return %c0_i32, %c0_i32_0, %c0_i32_1 : i32, i32, i32
  }
  func.func @transform_4(%arg0: i32) -> (i32, i32) {
    %c0_i32 = arith.constant 0 : i32
    %c0_i32_0 = arith.constant 0 : i32
    %c0_i32_1 = arith.constant 0 : i32
    return %c0_i32, %c0_i32_0 : i32, i32
  }
  func.func @transform_5(%arg0: i32) -> (i32, i32, i32) {
    %c0_i32 = arith.constant 0 : i32
    %c0_i32_0 = arith.constant 0 : i32
    %c0_i32_1 = arith.constant 0 : i32
    return %arg0, %c0_i32, %c0_i32_0 : i32, i32, i32
  }
}

</mosaic_0001>

<llo_original>
// kernel: tpu_custom_call.1
$region0: #{tpu_custom_call.1}
  #allocation0 [shape = 'u32[]', space=smem, size = 0x4, offset = 0x4, fixed_abs, tag = 'smem constant byte address 0x4 - core index']
  #allocation1 [shape = 'u32[144,128]{1,0:T(1,128)}', space=vmem, size = 0x12000, scoped, tag = 'internal scratch']
  %s0 = inlined_call_operand.vmem [shape: f32[2,16,4], index: 0, kind: input, shape index: {}]
  %s1 = inlined_call_operand.vmem [shape: f32[2,16,32], index: 1, kind: input, shape index: {}]
  %s2 = inlined_call_operand.hbm [shape: f32[16,16], index: 2, kind: input, shape index: {}]
  %s3 = inlined_call_operand.hbm [shape: f32[4,16,64], index: 3, kind: input, shape index: {}]
  %s4 = inlined_call_operand.vmem [shape: f32[1,64], index: 4, kind: input, shape index: {}]
  %s5 = inlined_call_operand.hbm [shape: f32[2,16,32], index: 5, kind: output, shape index: {}]
  %s6 = sld [smem:[#allocation0]]
  $region61: #{tpu_custom_call.1} parent=0
    _
  %s8 = ssub.s32 1, %s6
  %s9 = scalar_select 0, %s8, %s6
  $region1: #{tpu_custom_call.1} parent=0
    #allocation2 [shape = 'u8[8192]{0}', space=vmem, size = 0x2000, scoped, tag = 'input window, operand 2, single buffered']
    #allocation3 [shape = 's32[2]{0}', space=sflag, size = 0x8, scoped, tag = 'scoped memory for tpu_custom_call.1']
    #allocation4 [shape = 's32[2]{0}', space=sflag, size = 0x8, scoped, tag = 'scoped memory for tpu_custom_call.1']
    #allocation5 [shape = 'u8[32768]{0}', space=vmem, size = 0x8000, scoped, tag = 'input window, operand 3, single buffered']
    #allocation6 [shape = 's32[1]{0}', space=sflag, size = 0x4, scoped, tag = 'scoped memory for tpu_custom_call.1']
    #allocation7 [shape = 'u8[16384]{0}', space=vmem, size = 0x4000, scoped, tag = 'output window, operand 0']
    %10 = vsyncpa [#allocation3], 0
    %11 = vsyncpa [#allocation6], 0
    %12 = vsyncpa [#allocation4], 0
    %s13 = scalar_lea.sflag [#allocation4], 1
    %14 = vsyncpa %s13, 0
    loop: start=0, step=1, limit=4
    $region2: #{tpu_custom_call.1} parent=1 // loop_pre_header
      _
    $region3: #{tpu_custom_call.1} parent=1 // loop_header
      %s16 = sphi 0, %s20
      %p17 = scmp.ge.s32.totalorder %s16, 4
      %s26 = sphi 0, %s28
      %s29 = sphi 0, %s26
      %s30 = sphi 0, %s29
      %s46 = sphi 0, %s30
      %s52 = sphi 0, %s54
      %s55 = sphi 0, %s52
      %s56 = sphi 0, %s55
      %s72 = sphi 0, %s56
      %s76 = sphi 0, %s76
      %s78 = sphi 0, %s76
      %s79 = sphi 0, %s78
      %s93 = sphi 0, %s79
      %s97 = sphi 0, %s97
      %s99 = sphi 0, %s97
      %s100 = sphi 0, %s99
      %s114 = sphi 0, %s100
      %s118 = sphi 0, %s118
      %s120 = sphi 0, %s118
      %s121 = sphi 0, %s120
      %s135 = sphi 0, %s121
      %s141 = sphi 0, %s143
      %s144 = sphi 0, %s141
      %s145 = sphi 0, %s144
      %s161 = sphi 0, %s145
    $region4: #{tpu_custom_call.1} parent=1 // loop_header_branch
      %19 = sbr.rel (%p17) target = $region8
    $region5: #{tpu_custom_call.1} parent=1 // loop_body
      %s21 = ssub.s32 %s16, 1
      %s22 = ssub.s32 %s16, 2
      %s23 = sadd.s32 %s16, 1
      %s24 = ssub.s32 %s16, %s23
      %p25 = scmp.eq.s32.totalorder %s24, 0
      %s27 = sadd.s32 %s26, 1
      %s28 = scalar_select %p25, %s26, %s27
      %p31 = pneg %p25
      %p32 = scmp.eq.s32.totalorder %s16, 1
      %p33 = por %p31, %p32
      %p34 = scmp.ne.s32.totalorder %s26, %s29
      %p35 = scmp.eq.s32.totalorder %s16, 0
      %p36 = por %p34, %p35
      %p37 = scmp.ne.s32.totalorder %s26, %s29
      %p38 = scmp.eq.s32.totalorder %s21, 1
      %p39 = por %p37, %p38
      %p40 = scmp.ne.s32.totalorder %s29, %s30
      %p41 = scmp.eq.s32.totalorder %s21, 0
      %p42 = por %p40, %p41
      %p43 = scmp.ne.s32.totalorder %s29, %s30
      %p44 = scmp.eq.s32.totalorder %s22, 1
      %p45 = por %p43, %p44
      %p47 = scmp.ne.s32.totalorder %s30, %s46
      %p48 = scmp.eq.s32.totalorder %s22, 0
      %p49 = por %p47, %p48
      %s50 = ssub.s32 %s16, %s23
      %p51 = scmp.eq.s32.totalorder %s50, 0
      %s53 = sadd.s32 %s52, 1
      %s54 = scalar_select %p51, %s52, %s53
      %p57 = pneg %p51
      %p58 = scmp.eq.s32.totalorder %s16, 1
      %p59 = por %p57, %p58
      %p60 = scmp.ne.s32.totalorder %s52, %s55
      %p61 = scmp.eq.s32.totalorder %s16, 0
      %p62 = por %p60, %p61
      %p63 = scmp.ne.s32.totalorder %s52, %s55
      %p64 = scmp.eq.s32.totalorder %s21, 1
      %p65 = por %p63, %p64
      %p66 = scmp.ne.s32.totalorder %s55, %s56
      %p67 = scmp.eq.s32.totalorder %s21, 0
      %p68 = por %p66, %p67
      %p69 = scmp.ne.s32.totalorder %s55, %s56
      %p70 = scmp.eq.s32.totalorder %s22, 1
      %p71 = por %p69, %p70
      %p73 = scmp.ne.s32.totalorder %s56, %s72
      %p74 = scmp.eq.s32.totalorder %s22, 0
      %p75 = por %p73, %p74
      %s77 = sadd.s32 %s76, 1
      %p80 = scmp.eq.s32.totalorder %s16, 1
      %p81 = scmp.ne.s32.totalorder %s76, %s78
      %p82 = scmp.eq.s32.totalorder %s16, 0
      %p83 = por %p81, %p82
      %p84 = scmp.ne.s32.totalorder %s76, %s78
      %p85 = scmp.eq.s32.totalorder %s21, 1
      %p86 = por %p84, %p85
      %p87 = scmp.ne.s32.totalorder %s78, %s79
      %p88 = scmp.eq.s32.totalorder %s21, 0
      %p89 = por %p87, %p88
      %p90 = scmp.ne.s32.totalorder %s78, %s79
      %p91 = scmp.eq.s32.totalorder %s22, 1
      %p92 = por %p90, %p91
      %p94 = scmp.ne.s32.totalorder %s79, %s93
      %p95 = scmp.eq.s32.totalorder %s22, 0
      %p96 = por %p94, %p95
      %s98 = sadd.s32 %s97, 1
      %p101 = scmp.eq.s32.totalorder %s16, 1
      %p102 = scmp.ne.s32.totalorder %s97, %s99
      %p103 = scmp.eq.s32.totalorder %s16, 0
      %p104 = por %p102, %p103
      %p105 = scmp.ne.s32.totalorder %s97, %s99
      %p106 = scmp.eq.s32.totalorder %s21, 1
      %p107 = por %p105, %p106
      %p108 = scmp.ne.s32.totalorder %s99, %s100
      %p109 = scmp.eq.s32.totalorder %s21, 0
      %p110 = por %p108, %p109
      %p111 = scmp.ne.s32.totalorder %s99, %s100
      %p112 = scmp.eq.s32.totalorder %s22, 1
      %p113 = por %p111, %p112
      %p115 = scmp.ne.s32.totalorder %s100, %s114
      %p116 = scmp.eq.s32.totalorder %s22, 0
      %p117 = por %p115, %p116
      %s119 = sadd.s32 %s118, 1
      %p122 = scmp.eq.s32.totalorder %s16, 1
      %p123 = scmp.ne.s32.totalorder %s118, %s120
      %p124 = scmp.eq.s32.totalorder %s16, 0
      %p125 = por %p123, %p124
      %p126 = scmp.ne.s32.totalorder %s118, %s120
      %p127 = scmp.eq.s32.totalorder %s21, 1
      %p128 = por %p126, %p127
      %p129 = scmp.ne.s32.totalorder %s120, %s121
      %p130 = scmp.eq.s32.totalorder %s21, 0
      %p131 = por %p129, %p130
      %p132 = scmp.ne.s32.totalorder %s120, %s121
      %p133 = scmp.eq.s32.totalorder %s22, 1
      %p134 = por %p132, %p133
      %p136 = scmp.ne.s32.totalorder %s121, %s135
      %p137 = scmp.eq.s32.totalorder %s22, 0
      %p138 = por %p136, %p137
      %s139 = ssub.s32 %s16, %s23
      %p140 = scmp.eq.s32.totalorder %s139, 0
      %s142 = sadd.s32 %s141, 1
      %s143 = scalar_select %p140, %s141, %s142
      %p146 = pneg %p140
      %p147 = scmp.eq.s32.totalorder %s16, 1
      %p148 = por %p146, %p147
      %p149 = scmp.ne.s32.totalorder %s141, %s144
      %p150 = scmp.eq.s32.totalorder %s16, 0
      %p151 = por %p149, %p150
      %p152 = scmp.ne.s32.totalorder %s141, %s144
      %p153 = scmp.eq.s32.totalorder %s21, 1
      %p154 = por %p152, %p153
      %p155 = scmp.ne.s32.totalorder %s144, %s145
      %p156 = scmp.eq.s32.totalorder %s21, 0
      %p157 = por %p155, %p156
      %p158 = scmp.ne.s32.totalorder %s144, %s145
      %p159 = scmp.eq.s32.totalorder %s22, 1
      %p160 = por %p158, %p159
      %p162 = scmp.ne.s32.totalorder %s145, %s161
      %p163 = scmp.eq.s32.totalorder %s22, 0
      %p164 = por %p162, %p163
      %p165 = scmp.le.s32.totalorder 1, %s16
      %p166 = scmp.lt.s32.totalorder %s16, 3
      %p167 = pnand %p165, %p166
      %p168 = pneg %p167
      // Predicated region
      $region9: #{tpu_custom_call.1} parent=5 // pred_check
        _
      $region10: #{tpu_custom_call.1} parent=5 // pred_check_branch
        %170 = sbr.rel (%p167) target = $region12
      $region11: #{tpu_custom_call.1} parent=5 // pred_region
        %s171 = ssub.s32 %s16, 1
        // Predicated region
        $region13: #{tpu_custom_call.1} parent=11 // pred_check
          %p172 = pneg %p89
        $region14: #{tpu_custom_call.1} parent=11 // pred_check_branch
          %174 = sbr.rel (%p172) target = $region16
        $region15: #{tpu_custom_call.1} parent=11 // pred_region
          %s176 = ssub.s32 256, 256
          %177 = vsyncadd [#allocation3], %s176
          %s178 = sshll.u32 [#allocation2], 4
          %s179 = int_to_ptr.vmem [resolvable:$true] %s178
          %184 = dma.hbm_to_vmem [thread:$0]  %s2, 256, %s179, [#allocation3], 128, 128, 8
        $region16: #{tpu_custom_call.1} parent=11 // pred_fallthru
          _
        // Predicated region
        $region17: #{tpu_custom_call.1} parent=11 // pred_check
          %p185 = pneg %p110
        $region18: #{tpu_custom_call.1} parent=11 // pred_check_branch
          %187 = sbr.rel (%p185) target = $region20
        $region19: #{tpu_custom_call.1} parent=11 // pred_region
          %s189 = ssub.s32 1024, 1024
          %190 = vsyncadd [#allocation6], %s189
          %s191 = sshll.u32 [#allocation5], 4
          %s192 = int_to_ptr.vmem [resolvable:$true] %s191
          %197 = dma.hbm_to_vmem [thread:$0]  %s3, 1024, %s192, [#allocation6], 128, 128, 8
        $region20: #{tpu_custom_call.1} parent=11 // pred_fallthru
          _
        // Predicated region
        $region21: #{tpu_custom_call.1} parent=11 // pred_check
          %p198 = pneg %p131
        $region22: #{tpu_custom_call.1} parent=11 // pred_check_branch
          %200 = sbr.rel (%p198) target = $region24
        $region23: #{tpu_custom_call.1} parent=11 // pred_region
          _
        $region24: #{tpu_custom_call.1} parent=11 // pred_fallthru
          _
      $region12: #{tpu_custom_call.1} parent=5 // pred_fallthru
        _
      %p201 = scmp.lt.s32.totalorder %s16, 2
      // Predicated region
      $region25: #{tpu_custom_call.1} parent=5 // pred_check
        %p202 = pneg %p201
      $region26: #{tpu_custom_call.1} parent=5 // pred_check_branch
        %204 = sbr.rel (%p202) target = $region28
      $region27: #{tpu_custom_call.1} parent=5 // pred_region
        // Predicated region
        $region29: #{tpu_custom_call.1} parent=27 // pred_check
          %p205 = pneg %p36
        $region30: #{tpu_custom_call.1} parent=27 // pred_check_branch
          %207 = sbr.rel (%p205) target = $region32
        $region31: #{tpu_custom_call.1} parent=27 // pred_region
          %p208 = scmp.lt.s32.totalorder %s16, 1
          %s209 = scalar_select %p208, %s16, 1
          %s210 = smul.addr %s209, 2
          %s211 = smul.addr %s210, 8
          %s212 = scalar_lea.vmem %s0, %s211
        $region32: #{tpu_custom_call.1} parent=27 // pred_fallthru
          _
        // Predicated region
        $region33: #{tpu_custom_call.1} parent=27 // pred_check
          %p213 = pneg %p62
        $region34: #{tpu_custom_call.1} parent=27 // pred_check_branch
          %215 = sbr.rel (%p213) target = $region36
        $region35: #{tpu_custom_call.1} parent=27 // pred_region
          %p216 = scmp.lt.s32.totalorder %s16, 1
          %s217 = scalar_select %p216, %s16, 1
          %s218 = smul.addr %s217, 2
          %s219 = smul.addr %s218, 8
          %s220 = scalar_lea.vmem %s1, %s219
        $region36: #{tpu_custom_call.1} parent=27 // pred_fallthru
          _
      $region28: #{tpu_custom_call.1} parent=5 // pred_fallthru
        _
      %p221 = scmp.le.s32.totalorder 1, %s16
      %p222 = scmp.lt.s32.totalorder %s16, 3
      %p223 = pnand %p221, %p222
      %p224 = pneg %p223
      // Predicated region
      $region37: #{tpu_custom_call.1} parent=5 // pred_check
        _
      $region38: #{tpu_custom_call.1} parent=5 // pred_check_branch
        %226 = sbr.rel (%p223) target = $region40
      $region39: #{tpu_custom_call.1} parent=5 // pred_region
        %s227 = ssub.s32 %s16, 1
        // Predicated region
        $region41: #{tpu_custom_call.1} parent=39 // pred_check
          %p228 = pneg %p89
        $region42: #{tpu_custom_call.1} parent=39 // pred_check_branch
          %230 = sbr.rel (%p228) target = $region44
        $region43: #{tpu_custom_call.1} parent=39 // pred_region
          %231 = dma.done [#allocation3], 256
        $region44: #{tpu_custom_call.1} parent=39 // pred_fallthru
          _
        // Predicated region
        $region45: #{tpu_custom_call.1} parent=39 // pred_check
          %p232 = pneg %p110
        $region46: #{tpu_custom_call.1} parent=39 // pred_check_branch
          %234 = sbr.rel (%p232) target = $region48
        $region47: #{tpu_custom_call.1} parent=39 // pred_region
          %235 = dma.done [#allocation6], 1024
        $region48: #{tpu_custom_call.1} parent=39 // pred_fallthru
          _
        %p236 = scmp.lt.s32.totalorder %s21, 1
        %s237 = scalar_select %p236, %s21, 1
        %s238 = smul.addr %s237, 2
        %s239 = smul.addr %s238, 8
        %s240 = scalar_lea.vmem %s0, %s239
        %p241 = pneg %p42
        %p242 = pneg %p39
        %p243 = scmp.lt.s32.totalorder %s21, 1
        %s244 = scalar_select %p243, %s21, 1
        %s245 = smul.addr %s244, 2
        %s246 = smul.addr %s245, 8
        %s247 = scalar_lea.vmem %s1, %s246
        %p248 = pneg %p68
        %p249 = pneg %p65
        %p250 = pneg %p89
        %p251 = pneg %p86
        %p252 = pneg %p110
        %p253 = pneg %p107
        %p254 = pneg %p131
        %p255 = pneg %p128
        %p256 = pneg %p157
        %p257 = pneg %p154
        %s258 = sand.u32 %s144, 1
        %s259 = scalar_lea.sflag [#allocation4], %s258
        %s260 = sand.u32 %s144, 1
        %s261 = smul.addr %s260, 16
        %s262 = scalar_lea.vmem [#allocation7], %s261
        %p263 = scmp.lt.s32.totalorder %s21, 1
        %s264 = scalar_select %p263, %s21, 1
        %s265 = smul.addr %s264, 2
        %s266 = smul.addr %s265, 8
        %s267 = scalar_lea.vmem %s0, %s266
        %p268 = scmp.lt.s32.totalorder %s21, 1
        %s269 = scalar_select %p268, %s21, 1
        %s270 = smul.addr %s269, 2
        %s271 = smul.addr %s270, 8
        %s272 = scalar_lea.vmem %s1, %s271
        %v273 = vld [vmem:[%s267] sm:$0xff]
        %v274 = vld [vmem:[%s267 + $0x8] sm:$0xff]
        %v275 = vld [vmem:[#allocation5] sm:$0xff]
        %v276 = vld [vmem:[#allocation5 + $0x8] sm:$0xff]
        %v277 = vld [vmem:[#allocation5 + $0x10] sm:$0xff]
        %v278 = vld [vmem:[#allocation5 + $0x18] sm:$0xff]
        %v279 = vld [vmem:[#allocation5 + $0x20] sm:$0xff]
        %v280 = vld [vmem:[#allocation5 + $0x28] sm:$0xff]
        %v281 = vld [vmem:[#allocation5 + $0x30] sm:$0xff]
        %v282 = vld [vmem:[#allocation5 + $0x38] sm:$0xff]
        %v283 = vld [vmem:[#allocation2] sm:$0xff]
        %v284 = vld [vmem:[#allocation2 + $0x8] sm:$0xff]
        %v285 = vld [vmem:[%s4] sm:$0x1]
        %287 = vset.pattern.permute.xlu0 0
        %288 = vperm.xlu0 %287, %v273
        %v289 = vpop.permute.xlu0 %288
        %292 = vset.pattern.permute.xlu0 0
        %293 = vperm.xlu0 %292, %v274
        %v294 = vpop.permute.xlu0 %293
        %v296 = vmul.f32 %v289, %v275
        %v297 = vmul.f32 %v294, %v276
        %298 = vset.pattern.permute.xlu0 1
        %299 = vperm.xlu0 %298, %v273
        %v300 = vpop.permute.xlu0 %299
        %302 = vset.pattern.permute.xlu0 1
        %303 = vperm.xlu0 %302, %v274
        %v304 = vpop.permute.xlu0 %303
        %v306 = vmul.f32 %v300, %v277
        %v307 = vmul.f32 %v304, %v278
        %v308 = vadd.f32 %v296, %v306
        %v309 = vadd.f32 %v297, %v307
        %310 = vset.pattern.permute.xlu0 2
        %311 = vperm.xlu0 %310, %v273
        %v312 = vpop.permute.xlu0 %311
        %314 = vset.pattern.permute.xlu0 2
        %315 = vperm.xlu0 %314, %v274
        %v316 = vpop.permute.xlu0 %315
        %v318 = vmul.f32 %v312, %v279
        %v319 = vmul.f32 %v316, %v280
        %v320 = vadd.f32 %v308, %v318
        %v321 = vadd.f32 %v309, %v319
        %322 = vset.pattern.permute.xlu0 3
        %323 = vperm.xlu0 %322, %v273
        %v324 = vpop.permute.xlu0 %323
        %326 = vset.pattern.permute.xlu0 3
        %327 = vperm.xlu0 %326, %v274
        %v328 = vpop.permute.xlu0 %327
        %v330 = vmul.f32 %v324, %v281
        %v331 = vmul.f32 %v328, %v282
        %v332 = vadd.f32 %v320, %v330
        %v333 = vadd.f32 %v321, %v331
        %v335 = vlaneseq
        %v336 = vshrl.u32 %v335, 7
        %v337 = vsub.s32 0, %v336
        %v338 = vrot.slane %v285, %v337
        %vm340 = vcmask 130048
        %v342 = vsel %vm340, %v283, 0
        %v345 = vsel %vm340, %v284, 0
        %347 = vmatprep.subr.mxu0 0.0
        %348 = vmatpush1.msra.mxu0 0.0
        %349 = vmatprep.subr.mxu0 0.0
        %350 = vmatpush1.msra.mxu0 0.0
        %351 = vmatprep.subr.mxu0 0.0
        %352 = vmatpush1.msra.mxu0 0.0
        %353 = vmatprep.subr.mxu0 0.0
        %354 = vmatpush1.msra.mxu0 0.0
        %355 = vmatprep.subr.mxu0 0.0
        %356 = vmatpush1.msra.mxu0 0.0
        %357 = vmatprep.subr.mxu0 0.0
        %358 = vmatpush1.msra.mxu0 0.0
        %359 = vmatprep.subr.mxu0 0.0
        %360 = vmatpush1.msra.mxu0 0.0
        %361 = vmatprep.subr.mxu0 0.0
        %362 = vmatpush1.msra.mxu0 0.0
        %363 = vmatprep.subr.mxu0 0.0
        %364 = vmatpush1.msra.mxu0 0.0
        %365 = vmatprep.subr.mxu0 0.0
        %366 = vmatpush1.msra.mxu0 0.0
        %367 = vmatprep.subr.mxu0 0.0
        %368 = vmatpush1.msra.mxu0 0.0
        %369 = vmatprep.subr.mxu0 0.0
        %370 = vmatpush1.msra.mxu0 0.0
        %371 = vmatprep.subr.mxu0 0.0
        %372 = vmatpush1.msra.mxu0 0.0
        %373 = vmatprep.subr.mxu0 0.0
        %374 = vmatpush1.msra.mxu0 0.0
        %375 = vmatprep.subr.mxu0 0.0
        %v376 = vand.u32 %v333, 4294901760
        %377 = vmatpush1.msra.mxu0 %v376
        %378 = vmatprep.subr.mxu0 0.0
        %v379 = vand.u32 %v332, 4294901760
        %380 = vmatpush1.msra.mxu0 %v379
        %381 = vmatprep.subr.mxu0 0.0
        %382 = vmatpush2.msra.mxu0 0.0
        %383 = vmatprep.subr.mxu0 0.0
        %384 = vmatpush2.msra.mxu0 0.0
        %385 = vmatprep.subr.mxu0 0.0
        %386 = vmatpush2.msra.mxu0 0.0
        %387 = vmatprep.subr.mxu0 0.0
        %388 = vmatpush2.msra.mxu0 0.0
        %389 = vmatprep.subr.mxu0 0.0
        %390 = vmatpush2.msra.mxu0 0.0
        %391 = vmatprep.subr.mxu0 0.0
        %392 = vmatpush2.msra.mxu0 0.0
        %393 = vmatprep.subr.mxu0 0.0
        %394 = vmatpush2.msra.mxu0 0.0
        %395 = vmatprep.subr.mxu0 0.0
        %396 = vmatpush2.msra.mxu0 0.0
        %397 = vmatprep.subr.mxu0 0.0
        %398 = vmatpush2.msra.mxu0 0.0
        %399 = vmatprep.subr.mxu0 0.0
        %400 = vmatpush2.msra.mxu0 0.0
        %401 = vmatprep.subr.mxu0 0.0
        %402 = vmatpush2.msra.mxu0 0.0
        %403 = vmatprep.subr.mxu0 0.0
        %404 = vmatpush2.msra.mxu0 0.0
        %405 = vmatprep.subr.mxu0 0.0
        %406 = vmatpush2.msra.mxu0 0.0
        %407 = vmatprep.subr.mxu0 0.0
        %408 = vmatpush2.msra.mxu0 0.0
        %409 = vmatprep.subr.mxu0 0.0
        %410 = vmatpush2.msra.mxu0 0.0
        %411 = vmatprep.subr.mxu0 0.0
        %412 = vmatpush2.msra.mxu0 0.0
        %413 = vmatprep.mubr.f32.mxu0 0.0
        %v414 = vand.u32 %v342, 4294901760
        %v415 = vsub.f32 %v342, %v414
        %v416 = vand.u32 %v415, 4294901760
        %v417 = vsub.f32 %v415, %v416
        %v418 = vand.u32 %v417, 4294901760
        %419 = vmatmul.mubr.f32.gmra.mxu0 %v418
        %v420 = vpop.f32.mrf.mxu0
        %v421 = vadd.f32 %v338, %v420
        %v422 = vpop.f32.mrf.mxu0
        %423 = vmatprep.mubr.f32.mxu0 0.0
        %v424 = vand.u32 %v345, 4294901760
        %v425 = vsub.f32 %v345, %v424
        %v426 = vand.u32 %v425, 4294901760
        %v427 = vsub.f32 %v425, %v426
        %v428 = vand.u32 %v427, 4294901760
        %429 = vmatmul.mubr.f32.gmra.mxu0 %v428
        %v430 = vpop.f32.mrf.mxu0
        %v431 = vadd.f32 %v338, %v430
        %v432 = vpop.f32.mrf.mxu0
        %433 = vdwg.mxu0
        %434 = vmatprep.subr.mxu0 0.0
        %435 = vmatpush1.msra.mxu0 0.0
        %436 = vmatprep.subr.mxu0 0.0
        %437 = vmatpush1.msra.mxu0 0.0
        %438 = vmatprep.subr.mxu0 0.0
        %439 = vmatpush1.msra.mxu0 0.0
        %440 = vmatprep.subr.mxu0 0.0
        %441 = vmatpush1.msra.mxu0 0.0
        %442 = vmatprep.subr.mxu0 0.0
        %443 = vmatpush1.msra.mxu0 0.0
        %444 = vmatprep.subr.mxu0 0.0
        %445 = vmatpush1.msra.mxu0 0.0
        %446 = vmatprep.subr.mxu0 0.0
        %447 = vmatpush1.msra.mxu0 0.0
        %448 = vmatprep.subr.mxu0 0.0
        %449 = vmatpush1.msra.mxu0 0.0
        %450 = vmatprep.subr.mxu0 0.0
        %451 = vmatpush1.msra.mxu0 0.0
        %452 = vmatprep.subr.mxu0 0.0
        %453 = vmatpush1.msra.mxu0 0.0
        %454 = vmatprep.subr.mxu0 0.0
        %455 = vmatpush1.msra.mxu0 0.0
        %456 = vmatprep.subr.mxu0 0.0
        %457 = vmatpush1.msra.mxu0 0.0
        %458 = vmatprep.subr.mxu0 0.0
        %459 = vmatpush1.msra.mxu0 0.0
        %460 = vmatprep.subr.mxu0 0.0
        %461 = vmatpush1.msra.mxu0 0.0
        %462 = vmatprep.subr.mxu0 0.0
        %v463 = vand.u32 %v333, 4294901760
        %v464 = vsub.f32 %v333, %v463
        %v465 = vand.u32 %v464, 4294901760
        %v466 = vsub.f32 %v464, %v465
        %v467 = vand.u32 %v466, 4294901760
        %468 = vmatpush1.msra.mxu0 %v467
        %469 = vmatprep.subr.mxu0 0.0
        %v470 = vand.u32 %v332, 4294901760
        %v471 = vsub.f32 %v332, %v470
        %v472 = vand.u32 %v471, 4294901760
        %v473 = vsub.f32 %v471, %v472
        %v474 = vand.u32 %v473, 4294901760
        %475 = vmatpush1.msra.mxu0 %v474
        %476 = vmatprep.subr.mxu0 0.0
        %477 = vmatpush2.msra.mxu0 0.0
        %478 = vmatprep.subr.mxu0 0.0
        %479 = vmatpush2.msra.mxu0 0.0
        %480 = vmatprep.subr.mxu0 0.0
        %481 = vmatpush2.msra.mxu0 0.0
        %482 = vmatprep.subr.mxu0 0.0
        %483 = vmatpush2.msra.mxu0 0.0
        %484 = vmatprep.subr.mxu0 0.0
        %485 = vmatpush2.msra.mxu0 0.0
        %486 = vmatprep.subr.mxu0 0.0
        %487 = vmatpush2.msra.mxu0 0.0
        %488 = vmatprep.subr.mxu0 0.0
        %489 = vmatpush2.msra.mxu0 0.0
        %490 = vmatprep.subr.mxu0 0.0
        %491 = vmatpush2.msra.mxu0 0.0
        %492 = vmatprep.subr.mxu0 0.0
        %493 = vmatpush2.msra.mxu0 0.0
        %494 = vmatprep.subr.mxu0 0.0
        %495 = vmatpush2.msra.mxu0 0.0
        %496 = vmatprep.subr.mxu0 0.0
        %497 = vmatpush2.msra.mxu0 0.0
        %498 = vmatprep.subr.mxu0 0.0
        %499 = vmatpush2.msra.mxu0 0.0
        %500 = vmatprep.subr.mxu0 0.0
        %501 = vmatpush2.msra.mxu0 0.0
        %502 = vmatprep.subr.mxu0 0.0
        %503 = vmatpush2.msra.mxu0 0.0
        %504 = vmatprep.subr.mxu0 0.0
        %505 = vmatpush2.msra.mxu0 0.0
        %506 = vmatprep.subr.mxu0 0.0
        %507 = vmatpush2.msra.mxu0 0.0
        %508 = vmatprep.mubr.f32.mxu0 0.0
        %v509 = vand.u32 %v342, 4294901760
        %510 = vmatmul.mubr.f32.gmra.mxu0 %v509
        %v511 = vpop.f32.mrf.mxu0
        %v512 = vadd.f32 %v421, %v511
        %v513 = vpop.f32.mrf.mxu0
        %514 = vmatprep.mubr.f32.mxu0 0.0
        %v515 = vand.u32 %v345, 4294901760
        %516 = vmatmul.mubr.f32.gmra.mxu0 %v515
        %v517 = vpop.f32.mrf.mxu0
        %v518 = vadd.f32 %v431, %v517
        %v519 = vpop.f32.mrf.mxu0
        %520 = vdwg.mxu0
        %521 = vmatprep.subr.mxu0 0.0
        %522 = vmatpush1.msra.mxu0 0.0
        %523 = vmatprep.subr.mxu0 0.0
        %524 = vmatpush1.msra.mxu0 0.0
        %525 = vmatprep.subr.mxu0 0.0
        %526 = vmatpush1.msra.mxu0 0.0
        %527 = vmatprep.subr.mxu0 0.0
        %528 = vmatpush1.msra.mxu0 0.0
        %529 = vmatprep.subr.mxu0 0.0
        %530 = vmatpush1.msra.mxu0 0.0
        %531 = vmatprep.subr.mxu0 0.0
        %532 = vmatpush1.msra.mxu0 0.0
        %533 = vmatprep.subr.mxu0 0.0
        %534 = vmatpush1.msra.mxu0 0.0
        %535 = vmatprep.subr.mxu0 0.0
        %536 = vmatpush1.msra.mxu0 0.0
        %537 = vmatprep.subr.mxu0 0.0
        %538 = vmatpush1.msra.mxu0 0.0
        %539 = vmatprep.subr.mxu0 0.0
        %540 = vmatpush1.msra.mxu0 0.0
        %541 = vmatprep.subr.mxu0 0.0
        %542 = vmatpush1.msra.mxu0 0.0
        %543 = vmatprep.subr.mxu0 0.0
        %544 = vmatpush1.msra.mxu0 0.0
        %545 = vmatprep.subr.mxu0 0.0
        %546 = vmatpush1.msra.mxu0 0.0
        %547 = vmatprep.subr.mxu0 0.0
        %548 = vmatpush1.msra.mxu0 0.0
        %549 = vmatprep.subr.mxu0 0.0
        %v550 = vand.u32 %v333, 4294901760
        %v551 = vsub.f32 %v333, %v550
        %552 = vmatpush1.msra.mxu0 %v551
        %553 = vmatprep.subr.mxu0 0.0
        %v554 = vand.u32 %v332, 4294901760
        %v555 = vsub.f32 %v332, %v554
        %556 = vmatpush1.msra.mxu0 %v555
        %557 = vmatprep.subr.mxu0 0.0
        %558 = vmatpush2.msra.mxu0 0.0
        %559 = vmatprep.subr.mxu0 0.0
        %560 = vmatpush2.msra.mxu0 0.0
        %561 = vmatprep.subr.mxu0 0.0
        %562 = vmatpush2.msra.mxu0 0.0
        %563 = vmatprep.subr.mxu0 0.0
        %564 = vmatpush2.msra.mxu0 0.0
        %565 = vmatprep.subr.mxu0 0.0
        %566 = vmatpush2.msra.mxu0 0.0
        %567 = vmatprep.subr.mxu0 0.0
        %568 = vmatpush2.msra.mxu0 0.0
        %569 = vmatprep.subr.mxu0 0.0
        %570 = vmatpush2.msra.mxu0 0.0
        %571 = vmatprep.subr.mxu0 0.0
        %572 = vmatpush2.msra.mxu0 0.0
        %573 = vmatprep.subr.mxu0 0.0
        %574 = vmatpush2.msra.mxu0 0.0
        %575 = vmatprep.subr.mxu0 0.0
        %576 = vmatpush2.msra.mxu0 0.0
        %577 = vmatprep.subr.mxu0 0.0
        %578 = vmatpush2.msra.mxu0 0.0
        %579 = vmatprep.subr.mxu0 0.0
        %580 = vmatpush2.msra.mxu0 0.0
        %581 = vmatprep.subr.mxu0 0.0
        %582 = vmatpush2.msra.mxu0 0.0
        %583 = vmatprep.subr.mxu0 0.0
        %584 = vmatpush2.msra.mxu0 0.0
        %585 = vmatprep.subr.mxu0 0.0
        %586 = vmatpush2.msra.mxu0 0.0
        %587 = vmatprep.subr.mxu0 0.0
        %588 = vmatpush2.msra.mxu0 0.0
        %589 = vmatprep.mubr.f32.mxu0 0.0
        %v590 = vand.u32 %v342, 4294901760
        %v591 = vsub.f32 %v342, %v590
        %592 = vmatmul.mubr.f32.gmra.mxu0 %v591
        %v593 = vpop.f32.mrf.mxu0
        %v594 = vadd.f32 %v512, %v593
        %v595 = vpop.f32.mrf.mxu0
        %596 = vmatprep.mubr.f32.mxu0 0.0
        %v597 = vand.u32 %v345, 4294901760
        %v598 = vsub.f32 %v345, %v597
        %599 = vmatmul.mubr.f32.gmra.mxu0 %v598
        %v600 = vpop.f32.mrf.mxu0
        %v601 = vadd.f32 %v518, %v600
        %v602 = vpop.f32.mrf.mxu0
        %603 = vdwg.mxu0
        %604 = vmatprep.subr.mxu0 0.0
        %605 = vmatpush1.msra.mxu0 0.0
        %606 = vmatprep.subr.mxu0 0.0
        %607 = vmatpush1.msra.mxu0 0.0
        %608 = vmatprep.subr.mxu0 0.0
        %609 = vmatpush1.msra.mxu0 0.0
        %610 = vmatprep.subr.mxu0 0.0
        %611 = vmatpush1.msra.mxu0 0.0
        %612 = vmatprep.subr.mxu0 0.0
        %613 = vmatpush1.msra.mxu0 0.0
        %614 = vmatprep.subr.mxu0 0.0
        %615 = vmatpush1.msra.mxu0 0.0
        %616 = vmatprep.subr.mxu0 0.0
        %617 = vmatpush1.msra.mxu0 0.0
        %618 = vmatprep.subr.mxu0 0.0
        %619 = vmatpush1.msra.mxu0 0.0
        %620 = vmatprep.subr.mxu0 0.0
        %621 = vmatpush1.msra.mxu0 0.0
        %622 = vmatprep.subr.mxu0 0.0
        %623 = vmatpush1.msra.mxu0 0.0
        %624 = vmatprep.subr.mxu0 0.0
        %625 = vmatpush1.msra.mxu0 0.0
        %626 = vmatprep.subr.mxu0 0.0
        %627 = vmatpush1.msra.mxu0 0.0
        %628 = vmatprep.subr.mxu0 0.0
        %629 = vmatpush1.msra.mxu0 0.0
        %630 = vmatprep.subr.mxu0 0.0
        %631 = vmatpush1.msra.mxu0 0.0
        %632 = vmatprep.subr.mxu0 0.0
        %v633 = vand.u32 %v333, 4294901760
        %634 = vmatpush1.msra.mxu0 %v633
        %635 = vmatprep.subr.mxu0 0.0
        %v636 = vand.u32 %v332, 4294901760
        %637 = vmatpush1.msra.mxu0 %v636
        %638 = vmatprep.subr.mxu0 0.0
        %639 = vmatpush2.msra.mxu0 0.0
        %640 = vmatprep.subr.mxu0 0.0
        %641 = vmatpush2.msra.mxu0 0.0
        %642 = vmatprep.subr.mxu0 0.0
        %643 = vmatpush2.msra.mxu0 0.0
        %644 = vmatprep.subr.mxu0 0.0
        %645 = vmatpush2.msra.mxu0 0.0
        %646 = vmatprep.subr.mxu0 0.0
        %647 = vmatpush2.msra.mxu0 0.0
        %648 = vmatprep.subr.mxu0 0.0
        %649 = vmatpush2.msra.mxu0 0.0
        %650 = vmatprep.subr.mxu0 0.0
        %651 = vmatpush2.msra.mxu0 0.0
        %652 = vmatprep.subr.mxu0 0.0
        %653 = vmatpush2.msra.mxu0 0.0
        %654 = vmatprep.subr.mxu0 0.0
        %655 = vmatpush2.msra.mxu0 0.0
        %656 = vmatprep.subr.mxu0 0.0
        %657 = vmatpush2.msra.mxu0 0.0
        %658 = vmatprep.subr.mxu0 0.0
        %659 = vmatpush2.msra.mxu0 0.0
        %660 = vmatprep.subr.mxu0 0.0
        %661 = vmatpush2.msra.mxu0 0.0
        %662 = vmatprep.subr.mxu0 0.0
        %663 = vmatpush2.msra.mxu0 0.0
        %664 = vmatprep.subr.mxu0 0.0
        %665 = vmatpush2.msra.mxu0 0.0
        %666 = vmatprep.subr.mxu0 0.0
        %667 = vmatpush2.msra.mxu0 0.0
        %668 = vmatprep.subr.mxu0 0.0
        %669 = vmatpush2.msra.mxu0 0.0
        %670 = vmatprep.mubr.f32.mxu0 0.0
        %v671 = vand.u32 %v342, 4294901760
        %v672 = vsub.f32 %v342, %v671
        %v673 = vand.u32 %v672, 4294901760
        %674 = vmatmul.mubr.f32.gmra.mxu0 %v673
        %v675 = vpop.f32.mrf.mxu0
        %v676 = vadd.f32 %v594, %v675
        %v677 = vpop.f32.mrf.mxu0
        %678 = vmatprep.mubr.f32.mxu0 0.0
        %v679 = vand.u32 %v345, 4294901760
        %v680 = vsub.f32 %v345, %v679
        %v681 = vand.u32 %v680, 4294901760
        %682 = vmatmul.mubr.f32.gmra.mxu0 %v681
        %v683 = vpop.f32.mrf.mxu0
        %v684 = vadd.f32 %v601, %v683
        %v685 = vpop.f32.mrf.mxu0
        %686 = vdwg.mxu0
        %687 = vmatprep.subr.mxu0 0.0
        %688 = vmatpush1.msra.mxu0 0.0
        %689 = vmatprep.subr.mxu0 0.0
        %690 = vmatpush1.msra.mxu0 0.0
        %691 = vmatprep.subr.mxu0 0.0
        %692 = vmatpush1.msra.mxu0 0.0
        %693 = vmatprep.subr.mxu0 0.0
        %694 = vmatpush1.msra.mxu0 0.0
        %695 = vmatprep.subr.mxu0 0.0
        %696 = vmatpush1.msra.mxu0 0.0
        %697 = vmatprep.subr.mxu0 0.0
        %698 = vmatpush1.msra.mxu0 0.0
        %699 = vmatprep.subr.mxu0 0.0
        %700 = vmatpush1.msra.mxu0 0.0
        %701 = vmatprep.subr.mxu0 0.0
        %702 = vmatpush1.msra.mxu0 0.0
        %703 = vmatprep.subr.mxu0 0.0
        %704 = vmatpush1.msra.mxu0 0.0
        %705 = vmatprep.subr.mxu0 0.0
        %706 = vmatpush1.msra.mxu0 0.0
        %707 = vmatprep.subr.mxu0 0.0
        %708 = vmatpush1.msra.mxu0 0.0
        %709 = vmatprep.subr.mxu0 0.0
        %710 = vmatpush1.msra.mxu0 0.0
        %711 = vmatprep.subr.mxu0 0.0
        %712 = vmatpush1.msra.mxu0 0.0
        %713 = vmatprep.subr.mxu0 0.0
        %714 = vmatpush1.msra.mxu0 0.0
        %715 = vmatprep.subr.mxu0 0.0
        %v716 = vand.u32 %v333, 4294901760
        %v717 = vsub.f32 %v333, %v716
        %v718 = vand.u32 %v717, 4294901760
        %719 = vmatpush1.msra.mxu0 %v718
        %720 = vmatprep.subr.mxu0 0.0
        %v721 = vand.u32 %v332, 4294901760
        %v722 = vsub.f32 %v332, %v721
        %v723 = vand.u32 %v722, 4294901760
        %724 = vmatpush1.msra.mxu0 %v723
        %725 = vmatprep.subr.mxu0 0.0
        %726 = vmatpush2.msra.mxu0 0.0
        %727 = vmatprep.subr.mxu0 0.0
        %728 = vmatpush2.msra.mxu0 0.0
        %729 = vmatprep.subr.mxu0 0.0
        %730 = vmatpush2.msra.mxu0 0.0
        %731 = vmatprep.subr.mxu0 0.0
        %732 = vmatpush2.msra.mxu0 0.0
        %733 = vmatprep.subr.mxu0 0.0
        %734 = vmatpush2.msra.mxu0 0.0
        %735 = vmatprep.subr.mxu0 0.0
        %736 = vmatpush2.msra.mxu0 0.0
        %737 = vmatprep.subr.mxu0 0.0
        %738 = vmatpush2.msra.mxu0 0.0
        %739 = vmatprep.subr.mxu0 0.0
        %740 = vmatpush2.msra.mxu0 0.0
        %741 = vmatprep.subr.mxu0 0.0
        %742 = vmatpush2.msra.mxu0 0.0
        %743 = vmatprep.subr.mxu0 0.0
        %744 = vmatpush2.msra.mxu0 0.0
        %745 = vmatprep.subr.mxu0 0.0
        %746 = vmatpush2.msra.mxu0 0.0
        %747 = vmatprep.subr.mxu0 0.0
        %748 = vmatpush2.msra.mxu0 0.0
        %749 = vmatprep.subr.mxu0 0.0
        %750 = vmatpush2.msra.mxu0 0.0
        %751 = vmatprep.subr.mxu0 0.0
        %752 = vmatpush2.msra.mxu0 0.0
        %753 = vmatprep.subr.mxu0 0.0
        %754 = vmatpush2.msra.mxu0 0.0
        %755 = vmatprep.subr.mxu0 0.0
        %756 = vmatpush2.msra.mxu0 0.0
        %757 = vmatprep.mubr.f32.mxu0 0.0
        %v758 = vand.u32 %v342, 4294901760
        %759 = vmatmul.mubr.f32.gmra.mxu0 %v758
        %v760 = vpop.f32.mrf.mxu0
        %v761 = vadd.f32 %v676, %v760
        %v762 = vpop.f32.mrf.mxu0
        %763 = vmatprep.mubr.f32.mxu0 0.0
        %v764 = vand.u32 %v345, 4294901760
        %765 = vmatmul.mubr.f32.gmra.mxu0 %v764
        %v766 = vpop.f32.mrf.mxu0
        %v767 = vadd.f32 %v684, %v766
        %v768 = vpop.f32.mrf.mxu0
        %769 = vdwg.mxu0
        %770 = vmatprep.subr.mxu0 0.0
        %771 = vmatpush1.msra.mxu0 0.0
        %772 = vmatprep.subr.mxu0 0.0
        %773 = vmatpush1.msra.mxu0 0.0
        %774 = vmatprep.subr.mxu0 0.0
        %775 = vmatpush1.msra.mxu0 0.0
        %776 = vmatprep.subr.mxu0 0.0
        %777 = vmatpush1.msra.mxu0 0.0
        %778 = vmatprep.subr.mxu0 0.0
        %779 = vmatpush1.msra.mxu0 0.0
        %780 = vmatprep.subr.mxu0 0.0
        %781 = vmatpush1.msra.mxu0 0.0
        %782 = vmatprep.subr.mxu0 0.0
        %783 = vmatpush1.msra.mxu0 0.0
        %784 = vmatprep.subr.mxu0 0.0
        %785 = vmatpush1.msra.mxu0 0.0
        %786 = vmatprep.subr.mxu0 0.0
        %787 = vmatpush1.msra.mxu0 0.0
        %788 = vmatprep.subr.mxu0 0.0
        %789 = vmatpush1.msra.mxu0 0.0
        %790 = vmatprep.subr.mxu0 0.0
        %791 = vmatpush1.msra.mxu0 0.0
        %792 = vmatprep.subr.mxu0 0.0
        %793 = vmatpush1.msra.mxu0 0.0
        %794 = vmatprep.subr.mxu0 0.0
        %795 = vmatpush1.msra.mxu0 0.0
        %796 = vmatprep.subr.mxu0 0.0
        %797 = vmatpush1.msra.mxu0 0.0
        %798 = vmatprep.subr.mxu0 0.0
        %v799 = vand.u32 %v333, 4294901760
        %800 = vmatpush1.msra.mxu0 %v799
        %801 = vmatprep.subr.mxu0 0.0
        %v802 = vand.u32 %v332, 4294901760
        %803 = vmatpush1.msra.mxu0 %v802
        %804 = vmatprep.subr.mxu0 0.0
        %805 = vmatpush2.msra.mxu0 0.0
        %806 = vmatprep.subr.mxu0 0.0
        %807 = vmatpush2.msra.mxu0 0.0
        %808 = vmatprep.subr.mxu0 0.0
        %809 = vmatpush2.msra.mxu0 0.0
        %810 = vmatprep.subr.mxu0 0.0
        %811 = vmatpush2.msra.mxu0 0.0
        %812 = vmatprep.subr.mxu0 0.0
        %813 = vmatpush2.msra.mxu0 0.0
        %814 = vmatprep.subr.mxu0 0.0
        %815 = vmatpush2.msra.mxu0 0.0
        %816 = vmatprep.subr.mxu0 0.0
        %817 = vmatpush2.msra.mxu0 0.0
        %818 = vmatprep.subr.mxu0 0.0
        %819 = vmatpush2.msra.mxu0 0.0
        %820 = vmatprep.subr.mxu0 0.0
        %821 = vmatpush2.msra.mxu0 0.0
        %822 = vmatprep.subr.mxu0 0.0
        %823 = vmatpush2.msra.mxu0 0.0
        %824 = vmatprep.subr.mxu0 0.0
        %825 = vmatpush2.msra.mxu0 0.0
        %826 = vmatprep.subr.mxu0 0.0
        %827 = vmatpush2.msra.mxu0 0.0
        %828 = vmatprep.subr.mxu0 0.0
        %829 = vmatpush2.msra.mxu0 0.0
        %830 = vmatprep.subr.mxu0 0.0
        %831 = vmatpush2.msra.mxu0 0.0
        %832 = vmatprep.subr.mxu0 0.0
        %833 = vmatpush2.msra.mxu0 0.0
        %834 = vmatprep.subr.mxu0 0.0
        %835 = vmatpush2.msra.mxu0 0.0
        %836 = vmatprep.mubr.f32.mxu0 0.0
        %v837 = vand.u32 %v342, 4294901760
        %838 = vmatmul.mubr.f32.gmra.mxu0 %v837
        %v839 = vpop.f32.mrf.mxu0
        %v840 = vadd.f32 %v761, %v839
        %v841 = vpop.f32.mrf.mxu0
        %842 = vmatprep.mubr.f32.mxu0 0.0
        %v843 = vand.u32 %v345, 4294901760
        %844 = vmatmul.mubr.f32.gmra.mxu0 %v843
        %v845 = vpop.f32.mrf.mxu0
        %v846 = vadd.f32 %v767, %v845
        %v847 = vpop.f32.mrf.mxu0
        %848 = vdwg.mxu0
        %v849 = vxor.u32 %v840, 2147483648
        %v850 = vxor.u32 %v846, 2147483648
        %v851 = vmul.f32 %v849, 1.442695
        %v852 = vpow.pop %v851
        %v853 = vmul.f32 %v850, 1.442695
        %v854 = vpow.pop %v853
        %v855 = vadd.f32 %v852, 1.0
        %v856 = vadd.f32 %v854, 1.0
        %v857 = vrcp.pop %v855
        %v858 = vmul.f32 1.0, %v857
        %v859 = vrcp.pop %v856
        %v860 = vmul.f32 1.0, %v859
        %v861 = vtanh.pop %v840
        %v862 = vtanh.pop %v846
        %v863 = vld [vmem:[%s272] sm:$0xff]
        %v864 = vld [vmem:[%s272 + $0x8] sm:$0xff]
        %v865 = vmul.f32 %v858, %v863
        %v866 = vmul.f32 %v860, %v864
        %v867 = vsub.f32 1.0, %v858
        %v868 = vsub.f32 1.0, %v860
        %871 = vrot.lane.b32.xlu0 %v861, 96
        %v872 = vpop.permute.xlu0 %871
        %873 = vrot.lane.b32.xlu0 %v862, 96
        %v874 = vpop.permute.xlu0 %873
        %v877 = vmul.f32 %v867, %v872
        %v878 = vmul.f32 %v868, %v874
        %v879 = vadd.f32 %v865, %v877
        %v880 = vadd.f32 %v866, %v878
        %vm881 = vcmask 261120
        %882 = vst.msk [vmem:[%s262] sm:$0xff] %vm881, %v879
        %883 = vst.msk [vmem:[%s262 + $0x8] sm:$0xff] %vm881, %v880
        %s884 = sand.u32 %s144, 1
        %s885 = scalar_lea.sflag [#allocation4], %s884
        %s886 = sand.u32 %s144, 1
        %s887 = smul.addr %s886, 16
        %s888 = scalar_lea.vmem [#allocation7], %s887
        // Predicated region
        $region49: #{tpu_custom_call.1} parent=39 // pred_check
          %p889 = pneg %p154
        $region50: #{tpu_custom_call.1} parent=39 // pred_check_branch
          %891 = sbr.rel (%p889) target = $region52
        $region51: #{tpu_custom_call.1} parent=39 // pred_region
          %s893 = ssub.s32 256, 256
          %894 = vsyncadd %s885, %s893
          %s895 = smul.addr %s21, 2
          %s896 = smul.addr %s895, 128
          %s897 = scalar_lea.hbm %s5, %s896
          %s898 = sshll.u32 %s888, 4
          %s899 = int_to_ptr.vmem [resolvable:$true] %s898
          %904 = dma.vmem_to_hbm [thread:$0]  %s899, 256, %s897, %s885, 128, 128, 8
        $region52: #{tpu_custom_call.1} parent=39 // pred_fallthru
          _
      $region40: #{tpu_custom_call.1} parent=5 // pred_fallthru
        _
      %p905 = scmp.le.s32.totalorder 2, %s16
      // Predicated region
      $region53: #{tpu_custom_call.1} parent=5 // pred_check
        %p906 = pneg %p905
      $region54: #{tpu_custom_call.1} parent=5 // pred_check_branch
        %908 = sbr.rel (%p906) target = $region56
      $region55: #{tpu_custom_call.1} parent=5 // pred_region
        %s909 = ssub.s32 %s16, 2
        // Predicated region
        $region57: #{tpu_custom_call.1} parent=55 // pred_check
          %p910 = pneg %p160
        $region58: #{tpu_custom_call.1} parent=55 // pred_check_branch
          %912 = sbr.rel (%p910) target = $region60
        $region59: #{tpu_custom_call.1} parent=55 // pred_region
          %s913 = sand.u32 %s145, 1
          %s914 = scalar_lea.sflag [#allocation4], %s913
          %s915 = sand.u32 %s145, 1
          %s916 = smul.addr %s915, 16
          %s917 = scalar_lea.vmem [#allocation7], %s916
          %918 = dma.done %s914, 256
        $region60: #{tpu_custom_call.1} parent=55 // pred_fallthru
          _
      $region56: #{tpu_custom_call.1} parent=5 // pred_fallthru
        _
    $region6: #{tpu_custom_call.1} parent=1 // loop_footer
      %s20 = sadd.s32 1, %s16
    $region7: #{tpu_custom_call.1} parent=1 // loop_footer_branch
      %15 = sbr.rel target = $region3
    $region8: #{tpu_custom_call.1} parent=1 // loop_exit
      _
    %919 = vsyncpa [#allocation3], 1
    %s920 = scalar_lea.sflag [#allocation3], 1
    %921 = vsyncpa %s920, 1
    %922 = vsyncpa [#allocation6], 1
    %923 = vsyncpa [#allocation4], 1
    %s924 = scalar_lea.sflag [#allocation4], 1
    %925 = vsyncpa %s924, 1

</llo_original>
